<compile_context>
chip_gen: v7x
topology: tpu7x:2x2x1
jax: 0.10.0
libtpu: 0.0.40
codegen_flags: <defaults>
</compile_context>

<pallas_src>
import math

import jax
import jax.numpy as jnp
from jax.experimental import pallas as pl
from jax.experimental.pallas import tpu as pltpu

_SHIFT = math.log(2.0)  # plain Python float: no captured device constant

# dtype-native sublane tile (second-minor) per element size.
_SUBLANE = {4: 8, 2: 16, 1: 32}


def _shifted_softplus_kernel(x_ref, o_ref):
    x = x_ref[...]
    # Numerically stable softplus: log(1+exp(x)) = max(x,0) + log1p(exp(-|x|)).
    # Transcendental chain stays in bf16 for bf16 inputs (native EUP on
    # v6e/v7x -> ~2x EUP throughput; Mosaic inserts converts on v5e) and in
    # f32 otherwise.
    tdtype = jnp.bfloat16 if x.dtype == jnp.bfloat16 else jnp.float32
    t = jnp.log1p(jnp.exp(-jnp.abs(x.astype(tdtype))))
    sp = jnp.maximum(x.astype(jnp.float32), 0.0) + t.astype(jnp.float32)
    o_ref[...] = (sp - _SHIFT).astype(o_ref.dtype)


def _round_up(v, m):
    return ((v + m - 1) // m) * m


def _pick_tile_rows(M, K, itemsize, target_tile_bytes, min_split_bytes):
    """Pick the row-tile size for the (M, K) slab."""
    sub = _SUBLANE.get(itemsize, 8)
    total_bytes = M * K * itemsize
    # Tiny / medium inputs: one full-extent tile; a split would be pure
    # per-step overhead on single-TC chips (v5e/v6e).
    if M <= sub or total_bytes <= min_split_bytes:
        return M
    rows_budget = max(sub, target_tile_bytes // (K * itemsize))
    tm = max(sub, (min(M, rows_budget) // sub) * sub)
    g = pl.cdiv(M, tm)
    if g < 2:
        # Enough work to split: keeps both v7x TensorCores busy and overlaps
        # the output writeback with the next input DMA on 1-TC chips.
        tm = max(sub, _round_up(pl.cdiv(M, 2), sub))
    elif g % 2 == 1 and g <= 8:
        # A small odd grid leaves one v7x TC with an extra step; rebalance to
        # an even step count when a nearby tile size achieves it (capped at
        # 1.5x the tile-bytes budget so 4 double-buffered tiles stay < 32 MiB).
        for target_g in (g + 1, g - 1):
            if target_g < 2:
                continue
            cand = max(sub, _round_up(pl.cdiv(M, target_g), sub))
            if (pl.cdiv(M, cand) % 2 == 0
                    and cand * K * itemsize <= (3 * target_tile_bytes) // 2):
                tm = cand
                break
    return tm


def _compiler_params():
    return pltpu.CompilerParams(
        dimension_semantics=("parallel",),
        # Required on v5e (16 MiB default scoped limit); safe everywhere
        # (half of v7x's 64 MiB physical VMEM).
        vmem_limit_bytes=32 * 1024 * 1024,
    )


def _cost(n, itemsize):
    return pl.CostEstimate(
        flops=3 * n,
        transcendentals=2 * n,
        bytes_accessed=2 * n * itemsize,
    )


def shifted_softplus(x, *, target_tile_bytes=4 * 1024 * 1024,
                     min_split_bytes=1 << 20):
    """ShiftedSoftplus (softplus(x) - log 2) applied elementwise on TPU.

    Fast path (n % 128 == 0): the flat array is viewed (zero-copy) as a
    lane-dense (M, K) slab with K a multiple of 128 and processed with large
    double-buffered tiles.  Ragged sizes fall back to a 1-D kernel where
    Pallas masks the partial final block, so no host-side pad or output slice
    is ever materialized.
    """
    orig_shape = x.shape
    dtype = x.dtype
    n = x.size
    if n == 0:
        return x
    itemsize = jnp.dtype(dtype).itemsize
    flat = x.reshape(-1)

    # --- fast path: lane-dense 2-D slab, zero-copy reshape ------------------
    K = 0
    for width in (2048, 1024, 512, 256, 128):
        if n % width == 0:
            K = width
            break
    if K:
        M = n // K
        slab = flat.reshape(M, K)  # contiguous reshape: no HBM copy
        tm = _pick_tile_rows(M, K, itemsize, target_tile_bytes, min_split_bytes)
        out = pl.pallas_call(
            _shifted_softplus_kernel,
            out_shape=jax.ShapeDtypeStruct((M, K), dtype),
            grid_spec=pltpu.PrefetchScalarGridSpec(
                num_scalar_prefetch=0,
                grid=(pl.cdiv(M, tm),),
                in_specs=[pl.BlockSpec((tm, K), lambda i: (i, 0))],
                out_specs=pl.BlockSpec((tm, K), lambda i: (i, 0)),
            ),
            compiler_params=_compiler_params(),
            cost_estimate=_cost(n, itemsize),
        )(slab)
        return out.reshape(orig_shape)

    # --- ragged fallback: 1-D kernel, partial final block masked by Pallas --
    # No host-side pad and no output slice; slightly less lane-efficient
    # layout, but still a single HBM read+write pass (the thing that matters
    # for this mem-bound op).
    blk = max(1024, (min(target_tile_bytes, 1 << 20) // itemsize) // 1024 * 1024)
    if n <= blk:
        blk = n  # full-extent block (allowed for any size)
    out = pl.pallas_call(
        _shifted_softplus_kernel,
        out_shape=jax.ShapeDtypeStruct((n,), dtype),
        grid_spec=pltpu.PrefetchScalarGridSpec(
            num_scalar_prefetch=0,
            grid=(pl.cdiv(n, blk),),
            in_specs=[pl.BlockSpec((blk,), lambda i: (i,))],
            out_specs=pl.BlockSpec((blk,), lambda i: (i,)),
        ),
        compiler_params=_compiler_params(),
        cost_estimate=_cost(n, itemsize),
    )(flat)
    return out.reshape(orig_shape)


def _reference(x):
    xf = x.astype(jnp.float32)
    return (jax.nn.softplus(xf) - math.log(2.0)).astype(x.dtype)


if __name__ == "__main__":
    root = jax.random.PRNGKey(0)
    k1, k2, k3, k4 = jax.random.split(root, 4)

    # 1) SchNet-like hidden activations: (num_nodes=8, hidden=32), f32.
    x1 = jax.random.normal(k1, (8, 32), dtype=jnp.float32) * 3.0
    y1 = jax.block_until_ready(shifted_softplus(x1))
    assert y1.shape == x1.shape and y1.dtype == x1.dtype
    assert jnp.allclose(y1, _reference(x1), atol=1e-5, rtol=1e-5), "mismatch (small)"

    # 2) Multi-step grid on the fast path (small data; tiny tile budget forces
    #    an even >=2-step grid, exercising the tiling/rebalance logic).
    x2 = jax.random.normal(k2, (160, 128), dtype=jnp.float32) * 3.0
    y2 = jax.block_until_ready(
        shifted_softplus(x2, target_tile_bytes=32 * 1024, min_split_bytes=0))
    assert y2.shape == x2.shape and y2.dtype == x2.dtype
    assert jnp.allclose(y2, _reference(x2), atol=1e-5, rtol=1e-5), "mismatch (tiled)"

    # 3) Ragged size (n % 128 != 0): 1-D fallback, no host-side pad/slice.
    x3 = jax.random.normal(k3, (37, 29), dtype=jnp.float32) * 3.0
    y3 = jax.block_until_ready(shifted_softplus(x3))
    assert y3.shape == x3.shape and y3.dtype == x3.dtype
    assert jnp.allclose(y3, _reference(x3), atol=1e-5, rtol=1e-5), "mismatch (ragged)"

    # 4) bf16 path (transcendentals stay in bf16).
    x4 = (jax.random.normal(k4, (48, 64), dtype=jnp.float32) * 3.0).astype(jnp.bfloat16)
    y4 = jax.block_until_ready(shifted_softplus(x4))
    assert y4.shape == x4.shape and y4.dtype == x4.dtype
    ref4 = jax.nn.softplus(x4.astype(jnp.float32)) - math.log(2.0)
    assert jnp.allclose(y4.astype(jnp.float32), ref4, atol=2e-2, rtol=2e-2), "mismatch (bf16)"

    print("KERNEL_OK")
</pallas_src>

<mosaic_0001>
module attributes {stable_mosaic.version = 11 : i64} {
  func.func @_shifted_softplus_kernel(%arg0: i32, %arg1: memref<1x256xf32, #tpu.memory_space<vmem>>, %arg2: memref<1x256xf32, #tpu.memory_space<vmem>>) attributes {dimension_semantics = [#tpu.dimension_semantics<parallel>], iteration_bounds = array<i64: 1>, scalar_prefetch = 0 : i64, scratch_operands = 0 : i64, tpu.core_type = #tpu.core_type<tc>, window_params = [{transform_indices = @transform_0, window_bounds = array<i64: 1, 256>}, {transform_indices = @transform_1, window_bounds = array<i64: 1, 256>}]} {
    %c0 = arith.constant 0 : index
    %c0_0 = arith.constant 0 : index
    %0 = vector.load %arg1[%c0, %c0_0] : memref<1x256xf32, #tpu.memory_space<vmem>>, vector<1x256xf32>
    %1 = math.absf %0 : vector<1x256xf32>
    %cst = arith.constant 0.000000e+00 : f32
    %2 = vector.broadcast %cst : f32 to vector<1x256xf32>
    %3 = arith.subf %2, %1 : vector<1x256xf32>
    %4 = math.exp %3 : vector<1x256xf32>
    %5 = math.log1p %4 : vector<1x256xf32>
    %cst_1 = arith.constant 0.000000e+00 : f32
    %6 = vector.broadcast %cst_1 : f32 to vector<1x256xf32>
    %7 = arith.maximumf %0, %6 : vector<1x256xf32>
    %8 = arith.addf %7, %5 : vector<1x256xf32>
    %cst_2 = arith.constant 0.693147182 : f32
    %9 = vector.broadcast %cst_2 : f32 to vector<1x256xf32>
    %10 = arith.subf %8, %9 : vector<1x256xf32>
    %c0_3 = arith.constant 0 : index
    %c0_4 = arith.constant 0 : index
    %11 = vector.load %arg2[%c0_3, %c0_4] : memref<1x256xf32, #tpu.memory_space<vmem>>, vector<1x256xf32>
    tpu.vector_store %arg2[%c0_3, %c0_4], %10 {strides = array<i32>} : memref<1x256xf32, #tpu.memory_space<vmem>>, vector<1x256xf32>,
    return
  }
  func.func @transform_0(%arg0: i32) -> (i32, i32) {
    %c0_i32 = arith.constant 0 : i32
    %c0_i32_0 = arith.constant 0 : i32
    return %arg0, %c0_i32 : i32, i32
  }
  func.func @transform_1(%arg0: i32) -> (i32, i32) {
    %c0_i32 = arith.constant 0 : i32
    %c0_i32_0 = arith.constant 0 : i32
    return %arg0, %c0_i32 : i32, i32
  }
}

</mosaic_0001>

<llo_original>
// kernel: tpu_custom_call.1
$region0: #{tpu_custom_call.1}
  #allocation0 [shape = 'u32[]', space=smem, size = 0x4, offset = 0x4, fixed_abs, tag = 'smem constant byte address 0x4 - core index']
  #allocation1 [shape = 'u32[144,128]{1,0:T(1,128)}', space=vmem, size = 0x12000, scoped, tag = 'internal scratch']
  %s0 = inlined_call_operand.hbm [shape: f32[1,256], index: 0, kind: input, shape index: {}]
  %s1 = inlined_call_operand.hbm [shape: f32[1,256], index: 1, kind: output, shape index: {}]
  %s2 = sld [smem:[#allocation0]]
  $region18: #{tpu_custom_call.1} parent=0
    _
  %s4 = ssub.s32 1, %s2
  %s5 = scalar_select 0, %s4, %s2
  $region1: #{tpu_custom_call.1} parent=0
    #allocation2 [shape = 'u8[1024]{0}', space=vmem, size = 0x400, scoped, tag = 'input window, operand 0, single buffered']
    #allocation3 [shape = 's32[1]{0}', space=sflag, size = 0x4, scoped, tag = 'scoped memory for tpu_custom_call.1']
    #allocation4 [shape = 's32[1]{0}', space=sflag, size = 0x4, scoped, tag = 'scoped memory for tpu_custom_call.1']
    #allocation5 [shape = 'u8[1024]{0}', space=vmem, size = 0x400, scoped, tag = 'output window, operand 0, single buffered']
    %6 = vsyncpa [#allocation3], 0
    %7 = vsyncpa [#allocation4], 0
    // Predicated region
    $region2: #{tpu_custom_call.1} parent=1 // pred_check
      _
    $region3: #{tpu_custom_call.1} parent=1 // pred_check_branch
      %9 = sbr.rel (0) target = $region5
    $region4: #{tpu_custom_call.1} parent=1 // pred_region
      %s11 = ssub.s32 32, 32
      %12 = vsyncadd [#allocation3], %s11
      %s14 = sshll.u32 [#allocation2], 4
      %s15 = int_to_ptr.vmem [resolvable:$true] %s14
      %17 = dma.hbm_to_vmem [thread:$0]  %s0, 32, %s15, [#allocation3]
    $region5: #{tpu_custom_call.1} parent=1 // pred_fallthru
      _
    // Predicated region
    $region6: #{tpu_custom_call.1} parent=1 // pred_check
      _
    $region7: #{tpu_custom_call.1} parent=1 // pred_check_branch
      %19 = sbr.rel (0) target = $region9
    $region8: #{tpu_custom_call.1} parent=1 // pred_region
      %20 = dma.done [#allocation3], 32
    $region9: #{tpu_custom_call.1} parent=1 // pred_fallthru
      _
    %v21 = vld [vmem:[#allocation2] sm:$0x3]
    %v22 = vand.u32 2147483647, %v21
    %v23 = vsub.f32 0.0, %v22
    %v24 = vmul.f32 %v23, 1.442695
    %v25 = vpow.pop %v24
    %v26 = vadd.f32 %v25, 1.0
    %v27 = vlog2.pop %v26
    %v28 = vmul.f32 %v27, 0.6931472
    %v29 = vmul.f32 -0.5, %v25
    %v30 = vadd.f32 %v29, 1.0
    %v31 = vmul.f32 %v30, %v25
    %v32 = vand.u32 2147483647, %v25
    %vm33 = vcmp.lt.f32.partialorder %v32, 0.0004427343
    %v34 = vsel %vm33, %v31, %v28
    %v35 = vmax.f32 %v21, 0.0
    %v36 = vadd.f32 %v35, %v34
    %v37 = vsub.f32 %v36, 0.6931472
    %v38 = vlaneseq
    %vm39 = vcmp.ge.s32.totalorder %v38, 0
    %vm40 = vcmp.lt.s32.totalorder %v38, 256
    %vm41 = vmand %vm39, %vm40
    %42 = vst.msk [vmem:[#allocation5] sm:$0x3] %vm41, %v37
    // Predicated region
    $region10: #{tpu_custom_call.1} parent=1 // pred_check
      _
    $region11: #{tpu_custom_call.1} parent=1 // pred_check_branch
      %44 = sbr.rel (0) target = $region13
    $region12: #{tpu_custom_call.1} parent=1 // pred_region
      %s46 = ssub.s32 32, 32
      %47 = vsyncadd [#allocation4], %s46
      %s49 = sshll.u32 [#allocation5], 4
      %s50 = int_to_ptr.vmem [resolvable:$true] %s49
      %52 = dma.vmem_to_hbm [thread:$0]  %s50, 32, %s1, [#allocation4]
    $region13: #{tpu_custom_call.1} parent=1 // pred_fallthru
      _
    // Predicated region
    $region14: #{tpu_custom_call.1} parent=1 // pred_check
      _
    $region15: #{tpu_custom_call.1} parent=1 // pred_check_branch
      %54 = sbr.rel (0) target = $region17
    $region16: #{tpu_custom_call.1} parent=1 // pred_region
      %55 = dma.done [#allocation4], 32
    $region17: #{tpu_custom_call.1} parent=1 // pred_fallthru
      _
    %56 = vsyncpa [#allocation3], 1
    %57 = vsyncpa [#allocation4], 1

</llo_original>
